<compile_context>
chip_gen: v7x
topology: tpu7x:2x2x1
jax: 0.10.0
libtpu: 0.0.40
codegen_flags: <defaults>
</compile_context>

<pallas_src>
import functools

import jax
import jax.numpy as jnp
from jax.experimental import pallas as pl
from jax.experimental.pallas import tpu as pltpu

LN_EPS = 1e-5


def _round_up(n, m):
    return (n + m - 1) // m * m


def _ffn_ln_kernel(x_ref, w1_ref, w2_ref, o_ref, *, h_real):
    # x_ref: [tm, Hp] (compute dtype)   w1_ref: [Hp, Fp]   w2_ref: [Fp, Hp]
    # o_ref: [tm, Hp] f32 (lane-dense, padding sliced off in the wrapper)
    x = x_ref[...]

    # Linear1 (no bias) + ReLU.  bf16 operands feed the MXU directly; accumulate f32.
    h = jnp.dot(x, w1_ref[...], preferred_element_type=jnp.float32)
    h = jnp.maximum(h, 0.0)

    # Dropout == identity (inference).  Linear2 (no bias); cast h back to the MXU
    # operand dtype so both matmuls run at bf16 MXU throughput.
    y = jnp.dot(h.astype(w2_ref.dtype), w2_ref[...],
                preferred_element_type=jnp.float32)
    y = y + x.astype(jnp.float32)  # residual add in f32

    # LayerNorm over the *real* hidden dim (gamma=1, beta=0, biased variance).
    # Padded hidden columns of y are exactly zero (zero-padded x and weights), so
    # sums over the padded width equal sums over the real width and
    # var = E[y^2] - mean^2 needs no lane mask.
    inv_h = jnp.float32(1.0 / h_real)
    mean = jnp.sum(y, axis=-1, keepdims=True) * inv_h
    ex2 = jnp.sum(y * y, axis=-1, keepdims=True) * inv_h
    var = ex2 - mean * mean
    o_ref[...] = ((y - mean) * jax.lax.rsqrt(var + LN_EPS)).astype(o_ref.dtype)


def poswise_ffn(x, w1, w2, *, tm=256, compute_dtype=jnp.bfloat16):
    """x: [B, S, H]; w1: [H, d_ff]; w2: [d_ff, H].  Returns f32 [B, S, H]."""
    B, S, H = x.shape
    d_ff = w1.shape[1]
    M = B * S

    # Lane-dense padding: hidden / d_ff to multiples of 128 (lane + MXU width),
    # rows to a multiple of the row tile (no divisibility requirement on callers).
    Hp = _round_up(H, 128)
    Fp = _round_up(d_ff, 128)
    Mp = _round_up(M, tm)

    cd = jnp.dtype(compute_dtype)
    x2 = jnp.zeros((Mp, Hp), cd).at[:M, :H].set(x.reshape(M, H).astype(cd))
    w1p = jnp.zeros((Hp, Fp), cd).at[:H, :d_ff].set(w1.astype(cd))
    w2p = jnp.zeros((Fp, Hp), cd).at[:d_ff, :H].set(w2.astype(cd))

    # Scoped-VMEM budget: double-buffered activation tiles + resident weights
    # (worst case double-buffered) + f32 temporaries.  Only raise the limit when
    # the ~32 MiB default would actually be exceeded (large production d_ff).
    itm = cd.itemsize
    vmem_need = (2 * tm * Hp * itm            # x tiles
                 + 2 * tm * Hp * 4            # out tiles (f32)
                 + 2 * 2 * Hp * Fp * itm      # W1 + W2
                 + tm * Fp * 4                # h
                 + 2 * tm * Hp * 4)           # y / LN temporaries
    vmem_limit = None if vmem_need <= (32 << 20) else int(min(1.5 * vmem_need, 100 << 20))
    # TODO(synk): for production d_ff where resident W1/W2 overflow VMEM (v7x 64 MiB),
    # add a trailing "arbitrary" reduction axis over d_ff with a VMEM f32 accumulator
    # and do residual+LN under pl.when(k == last).

    out2 = pl.pallas_call(
        functools.partial(_ffn_ln_kernel, h_real=float(H)),
        out_shape=jax.ShapeDtypeStruct((Mp, Hp), jnp.float32),
        grid_spec=pltpu.PrefetchScalarGridSpec(
            num_scalar_prefetch=0,
            grid=(Mp // tm,),
            in_specs=[
                pl.BlockSpec((tm, Hp), lambda i: (i, 0)),   # activation row tile
                pl.BlockSpec((Hp, Fp), lambda i: (0, 0)),   # W1 (constant block -> fetched once)
                pl.BlockSpec((Fp, Hp), lambda i: (0, 0)),   # W2 (constant block -> fetched once)
            ],
            out_specs=pl.BlockSpec((tm, Hp), lambda i: (i, 0)),
        ),
        compiler_params=pltpu.CompilerParams(
            dimension_semantics=("parallel",),   # row axis shards across v7x's 2 TCs
            vmem_limit_bytes=vmem_limit,
        ),
    )(x2, w1p, w2p)

    return out2[:M, :H].reshape(B, S, H)


def _reference(x, w1, w2, compute_dtype=jnp.bfloat16):
    """Pure-JAX reference following the same bf16-operand / f32-accumulate path."""
    B, S, H = x.shape
    cd = jnp.dtype(compute_dtype)
    xc = x.reshape(-1, H).astype(cd)
    h = jnp.dot(xc, w1.astype(cd), preferred_element_type=jnp.float32)
    h = jnp.maximum(h, 0.0)
    y = jnp.dot(h.astype(cd), w2.astype(cd), preferred_element_type=jnp.float32)
    y = y + xc.astype(jnp.float32)
    mean = jnp.mean(y, axis=-1, keepdims=True)
    var = jnp.mean((y - mean) ** 2, axis=-1, keepdims=True)
    return ((y - mean) * jax.lax.rsqrt(var + LN_EPS)).reshape(B, S, H)


if __name__ == "__main__":
    B, S, H, d_ff = 2, 8, 32, 64  # hidden_size=32, args.proj_hidden=64

    key = jax.random.PRNGKey(0)
    kx, k1, k2 = jax.random.split(key, 3)
    x = jax.random.normal(kx, (B, S, H), dtype=jnp.float32)
    # Deterministic synthetic weights (no checkpoint load).
    w1 = jax.random.normal(k1, (H, d_ff), dtype=jnp.float32) * (1.0 / jnp.sqrt(H))
    w2 = jax.random.normal(k2, (d_ff, H), dtype=jnp.float32) * (1.0 / jnp.sqrt(d_ff))

    out = poswise_ffn(x, w1, w2, tm=256)
    out = jax.block_until_ready(out)

    ref = _reference(x, w1, w2)
    assert out.shape == (B, S, H)
    assert out.dtype == jnp.float32
    # Both paths use bf16 MXU operands with f32 accumulation; bf16-level tolerance.
    assert jnp.allclose(out, ref, atol=2e-2, rtol=2e-2), "mismatch vs reference"

    print("KERNEL_OK")
</pallas_src>

<mosaic_0001>
module attributes {stable_mosaic.version = 11 : i64} {
  func.func @_ffn_ln_kernel(%arg0: i32, %arg1: memref<256x128xbf16, #tpu.memory_space<vmem>>, %arg2: memref<128x128xbf16, #tpu.memory_space<vmem>>, %arg3: memref<128x128xbf16, #tpu.memory_space<vmem>>, %arg4: memref<256x128xf32, #tpu.memory_space<vmem>>) attributes {dimension_semantics = [#tpu.dimension_semantics<parallel>], iteration_bounds = array<i64: 1>, scalar_prefetch = 0 : i64, scratch_operands = 0 : i64, tpu.core_type = #tpu.core_type<tc>, window_params = [{transform_indices = @transform_0, window_bounds = array<i64: 256, 128>}, {pipeline_mode = #tpu.pipeline_mode<synchronous>, transform_indices = @transform_1, window_bounds = array<i64: 128, 128>}, {pipeline_mode = #tpu.pipeline_mode<synchronous>, transform_indices = @transform_2, window_bounds = array<i64: 128, 128>}, {transform_indices = @transform_3, window_bounds = array<i64: 256, 128>}]} {
    %c0 = arith.constant 0 : index
    %c0_0 = arith.constant 0 : index
    %0 = vector.load %arg1[%c0, %c0_0] : memref<256x128xbf16, #tpu.memory_space<vmem>>, vector<256x128xbf16>
    %c0_1 = arith.constant 0 : index
    %c0_2 = arith.constant 0 : index
    %1 = vector.load %arg2[%c0_1, %c0_2] : memref<128x128xbf16, #tpu.memory_space<vmem>>, vector<128x128xbf16>
    %cst = arith.constant dense<0.000000e+00> : vector<256x128xf32>
    %2 = tpu.matmul %0, %1, %cst {dimension_numbers = #tpu.dot_dimension_numbers<[1], [0], [0], [1], [0, 0, 1, 1], [], []>} : vector<256x128xbf16>, vector<128x128xbf16>, vector<256x128xf32> -> vector<256x128xf32>
    %cst_3 = arith.constant 0.000000e+00 : f32
    %3 = vector.broadcast %cst_3 : f32 to vector<256x128xf32>
    %4 = arith.maximumf %2, %3 : vector<256x128xf32>
    %5 = arith.truncf %4 : vector<256x128xf32> to vector<256x128xbf16>
    %c0_4 = arith.constant 0 : index
    %c0_5 = arith.constant 0 : index
    %6 = vector.load %arg3[%c0_4, %c0_5] : memref<128x128xbf16, #tpu.memory_space<vmem>>, vector<128x128xbf16>
    %cst_6 = arith.constant dense<0.000000e+00> : vector<256x128xf32>
    %7 = tpu.matmul %5, %6, %cst_6 {dimension_numbers = #tpu.dot_dimension_numbers<[1], [0], [0], [1], [0, 0, 1, 1], [], []>} : vector<256x128xbf16>, vector<128x128xbf16>, vector<256x128xf32> -> vector<256x128xf32>
    %8 = arith.extf %0 : vector<256x128xbf16> to vector<256x128xf32>
    %9 = arith.addf %7, %8 : vector<256x128xf32>
    %cst_7 = arith.constant dense<0.000000e+00> : vector<256xf32>
    %10 = vector.multi_reduction <add>, %9, %cst_7 [1] : vector<256x128xf32> to vector<256xf32>
    %11 = vector.shape_cast %10 : vector<256xf32> to vector<256x1xf32>
    %cst_8 = arith.constant 3.125000e-02 : f32
    %12 = vector.broadcast %cst_8 : f32 to vector<256x1xf32>
    %13 = arith.mulf %11, %12 : vector<256x1xf32>
    %14 = arith.mulf %9, %9 : vector<256x128xf32>
    %cst_9 = arith.constant dense<0.000000e+00> : vector<256xf32>
    %15 = vector.multi_reduction <add>, %14, %cst_9 [1] : vector<256x128xf32> to vector<256xf32>
    %16 = vector.shape_cast %15 : vector<256xf32> to vector<256x1xf32>
    %cst_10 = arith.constant 3.125000e-02 : f32
    %17 = vector.broadcast %cst_10 : f32 to vector<256x1xf32>
    %18 = arith.mulf %16, %17 : vector<256x1xf32>
    %19 = arith.mulf %13, %13 : vector<256x1xf32>
    %20 = arith.subf %18, %19 : vector<256x1xf32>
    %21 = vector.broadcast %13 : vector<256x1xf32> to vector<256x128xf32>
    %22 = arith.subf %9, %21 : vector<256x128xf32>
    %cst_11 = arith.constant 9.99999974E-6 : f32
    %23 = vector.broadcast %cst_11 : f32 to vector<256x1xf32>
    %24 = arith.addf %20, %23 : vector<256x1xf32>
    %25 = math.rsqrt %24 : vector<256x1xf32>
    %26 = vector.broadcast %25 : vector<256x1xf32> to vector<256x128xf32>
    %27 = arith.mulf %22, %26 : vector<256x128xf32>
    %c0_12 = arith.constant 0 : index
    %c0_13 = arith.constant 0 : index
    %28 = vector.load %arg4[%c0_12, %c0_13] : memref<256x128xf32, #tpu.memory_space<vmem>>, vector<256x128xf32>
    tpu.vector_store %arg4[%c0_12, %c0_13], %27 {strides = array<i32>} : memref<256x128xf32, #tpu.memory_space<vmem>>, vector<256x128xf32>,
    return
  }
  func.func @transform_0(%arg0: i32) -> (i32, i32) {
    %c0_i32 = arith.constant 0 : i32
    %c0_i32_0 = arith.constant 0 : i32
    return %arg0, %c0_i32 : i32, i32
  }
  func.func @transform_1(%arg0: i32) -> (i32, i32) {
    %c0_i32 = arith.constant 0 : i32
    %c0_i32_0 = arith.constant 0 : i32
    %c0_i32_1 = arith.constant 0 : i32
    return %c0_i32, %c0_i32_0 : i32, i32
  }
  func.func @transform_2(%arg0: i32) -> (i32, i32) {
    %c0_i32 = arith.constant 0 : i32
    %c0_i32_0 = arith.constant 0 : i32
    %c0_i32_1 = arith.constant 0 : i32
    return %c0_i32, %c0_i32_0 : i32, i32
  }
  func.func @transform_3(%arg0: i32) -> (i32, i32) {
    %c0_i32 = arith.constant 0 : i32
    %c0_i32_0 = arith.constant 0 : i32
    return %arg0, %c0_i32 : i32, i32
  }
}

</mosaic_0001>

<llo_original>
// kernel: tpu_custom_call.1
$region0: #{tpu_custom_call.1}
  #allocation0 [shape = 'u32[]', space=smem, size = 0x4, offset = 0x4, fixed_abs, tag = 'smem constant byte address 0x4 - core index']
  #allocation1 [shape = 'u32[144,128]{1,0:T(1,128)}', space=vmem, size = 0x12000, scoped, tag = 'internal scratch']
  %s0 = inlined_call_operand.hbm [shape: bf16[256,128], index: 0, kind: input, shape index: {}]
  %s1 = inlined_call_operand.hbm [shape: bf16[128,128], index: 1, kind: input, shape index: {}]
  %s2 = inlined_call_operand.hbm [shape: bf16[128,128], index: 2, kind: input, shape index: {}]
  %s3 = inlined_call_operand.hbm [shape: f32[256,128], index: 3, kind: output, shape index: {}]
  %s4 = sld [smem:[#allocation0]]
  $region34: #{tpu_custom_call.1} parent=0
    _
  %s6 = ssub.s32 1, %s4
  %s7 = scalar_select 0, %s6, %s4
  $region1: #{tpu_custom_call.1} parent=0
    #allocation2 [shape = 'u8[65536]{0}', space=vmem, size = 0x10000, scoped, tag = 'input window, operand 0, single buffered']
    #allocation3 [shape = 's32[1]{0}', space=sflag, size = 0x4, scoped, tag = 'scoped memory for tpu_custom_call.1']
    #allocation4 [shape = 's32[1]{0}', space=sflag, size = 0x4, scoped, tag = 'scoped memory for tpu_custom_call.1']
    #allocation5 [shape = 'u8[32768]{0}', space=vmem, size = 0x8000, scoped, tag = 'input window, operand 1, single buffered']
    #allocation6 [shape = 's32[1]{0}', space=sflag, size = 0x4, scoped, tag = 'scoped memory for tpu_custom_call.1']
    #allocation7 [shape = 'u8[32768]{0}', space=vmem, size = 0x8000, scoped, tag = 'input window, operand 2, single buffered']
    #allocation8 [shape = 'u8[131072]{0}', space=vmem, size = 0x20000, scoped, tag = 'output window, operand 0, single buffered']
    %8 = vsyncpa [#allocation3], 0
    %9 = vsyncpa [#allocation6], 0
    %10 = vsyncpa [#allocation4], 0
    // Predicated region
    $region2: #{tpu_custom_call.1} parent=1 // pred_check
      _
    $region3: #{tpu_custom_call.1} parent=1 // pred_check_branch
      %12 = sbr.rel (0) target = $region5
    $region4: #{tpu_custom_call.1} parent=1 // pred_region
      %s14 = ssub.s32 2048, 2048
      %15 = vsyncadd [#allocation3], %s14
      %s16 = sshll.u32 [#allocation2], 4
      %s17 = int_to_ptr.vmem [resolvable:$true] %s16
      %22 = dma.hbm_to_vmem [thread:$0]  %s0, 2048, %s17, [#allocation3], 64, 64, 4
    $region5: #{tpu_custom_call.1} parent=1 // pred_fallthru
      _
    // Predicated region
    $region6: #{tpu_custom_call.1} parent=1 // pred_check
      _
    $region7: #{tpu_custom_call.1} parent=1 // pred_check_branch
      %24 = sbr.rel (0) target = $region9
    $region8: #{tpu_custom_call.1} parent=1 // pred_region
      %s26 = ssub.s32 1024, 1024
      %27 = vsyncadd [#allocation6], %s26
      %s28 = sshll.u32 [#allocation5], 4
      %s29 = int_to_ptr.vmem [resolvable:$true] %s28
      %34 = dma.hbm_to_vmem [thread:$0]  %s1, 1024, %s29, [#allocation6], 64, 64, 4
    $region9: #{tpu_custom_call.1} parent=1 // pred_fallthru
      _
    // Predicated region
    $region10: #{tpu_custom_call.1} parent=1 // pred_check
      _
    $region11: #{tpu_custom_call.1} parent=1 // pred_check_branch
      %36 = sbr.rel (0) target = $region13
    $region12: #{tpu_custom_call.1} parent=1 // pred_region
      %s38 = ssub.s32 1024, 1024
      %39 = vsyncadd [#allocation6], %s38
      %s40 = sshll.u32 [#allocation7], 4
      %s41 = int_to_ptr.vmem [resolvable:$true] %s40
      %46 = dma.hbm_to_vmem [thread:$0]  %s2, 1024, %s41, [#allocation6], 64, 64, 4
    $region13: #{tpu_custom_call.1} parent=1 // pred_fallthru
      _
    // Predicated region
    $region14: #{tpu_custom_call.1} parent=1 // pred_check
      _
    $region15: #{tpu_custom_call.1} parent=1 // pred_check_branch
      %48 = sbr.rel (0) target = $region17
    $region16: #{tpu_custom_call.1} parent=1 // pred_region
      %49 = dma.done [#allocation3], 2048
    $region17: #{tpu_custom_call.1} parent=1 // pred_fallthru
      _
    // Predicated region
    $region18: #{tpu_custom_call.1} parent=1 // pred_check
      _
    $region19: #{tpu_custom_call.1} parent=1 // pred_check_branch
      %51 = sbr.rel (0) target = $region21
    $region20: #{tpu_custom_call.1} parent=1 // pred_region
      %52 = dma.done [#allocation6], 1024
    $region21: #{tpu_custom_call.1} parent=1 // pred_fallthru
      _
    // Predicated region
    $region22: #{tpu_custom_call.1} parent=1 // pred_check
      _
    $region23: #{tpu_custom_call.1} parent=1 // pred_check_branch
      %54 = sbr.rel (0) target = $region25
    $region24: #{tpu_custom_call.1} parent=1 // pred_region
      %55 = dma.done [#allocation6], 1024
    $region25: #{tpu_custom_call.1} parent=1 // pred_fallthru
      _
    %v57 = vld [vmem:[#allocation2] sm:$0xf]
    %v58 = vld [vmem:[#allocation2 + $0x4] sm:$0xf]
    %v59 = vld [vmem:[#allocation2 + $0x8] sm:$0xf]
    %v60 = vld [vmem:[#allocation2 + $0xc] sm:$0xf]
    %v61 = vld [vmem:[#allocation2 + $0x10] sm:$0xf]
    %v62 = vld [vmem:[#allocation2 + $0x14] sm:$0xf]
    %v63 = vld [vmem:[#allocation2 + $0x18] sm:$0xf]
    %v64 = vld [vmem:[#allocation2 + $0x1c] sm:$0xf]
    %v65 = vld [vmem:[#allocation2 + $0x20] sm:$0xf]
    %v66 = vld [vmem:[#allocation2 + $0x24] sm:$0xf]
    %v67 = vld [vmem:[#allocation2 + $0x28] sm:$0xf]
    %v68 = vld [vmem:[#allocation2 + $0x2c] sm:$0xf]
    %v69 = vld [vmem:[#allocation2 + $0x30] sm:$0xf]
    %v70 = vld [vmem:[#allocation2 + $0x34] sm:$0xf]
    %v71 = vld [vmem:[#allocation2 + $0x38] sm:$0xf]
    %v72 = vld [vmem:[#allocation2 + $0x3c] sm:$0xf]
    %v73 = vld [vmem:[#allocation2 + $0x40] sm:$0xf]
    %v74 = vld [vmem:[#allocation2 + $0x44] sm:$0xf]
    %v75 = vld [vmem:[#allocation2 + $0x48] sm:$0xf]
    %v76 = vld [vmem:[#allocation2 + $0x4c] sm:$0xf]
    %v77 = vld [vmem:[#allocation2 + $0x50] sm:$0xf]
    %v78 = vld [vmem:[#allocation2 + $0x54] sm:$0xf]
    %v79 = vld [vmem:[#allocation2 + $0x58] sm:$0xf]
    %v80 = vld [vmem:[#allocation2 + $0x5c] sm:$0xf]
    %v81 = vld [vmem:[#allocation2 + $0x60] sm:$0xf]
    %v82 = vld [vmem:[#allocation2 + $0x64] sm:$0xf]
    %v83 = vld [vmem:[#allocation2 + $0x68] sm:$0xf]
    %v84 = vld [vmem:[#allocation2 + $0x6c] sm:$0xf]
    %v85 = vld [vmem:[#allocation2 + $0x70] sm:$0xf]
    %v86 = vld [vmem:[#allocation2 + $0x74] sm:$0xf]
    %v87 = vld [vmem:[#allocation2 + $0x78] sm:$0xf]
    %v88 = vld [vmem:[#allocation2 + $0x7c] sm:$0xf]
    %v89 = vld [vmem:[#allocation5] sm:$0xf]
    %v90 = vld [vmem:[#allocation5 + $0x4] sm:$0xf]
    %v91 = vld [vmem:[#allocation5 + $0x8] sm:$0xf]
    %v92 = vld [vmem:[#allocation5 + $0xc] sm:$0xf]
    %v93 = vld [vmem:[#allocation5 + $0x10] sm:$0xf]
    %v94 = vld [vmem:[#allocation5 + $0x14] sm:$0xf]
    %v95 = vld [vmem:[#allocation5 + $0x18] sm:$0xf]
    %v96 = vld [vmem:[#allocation5 + $0x1c] sm:$0xf]
    %v97 = vld [vmem:[#allocation5 + $0x20] sm:$0xf]
    %v98 = vld [vmem:[#allocation5 + $0x24] sm:$0xf]
    %v99 = vld [vmem:[#allocation5 + $0x28] sm:$0xf]
    %v100 = vld [vmem:[#allocation5 + $0x2c] sm:$0xf]
    %v101 = vld [vmem:[#allocation5 + $0x30] sm:$0xf]
    %v102 = vld [vmem:[#allocation5 + $0x34] sm:$0xf]
    %v103 = vld [vmem:[#allocation5 + $0x38] sm:$0xf]
    %v104 = vld [vmem:[#allocation5 + $0x3c] sm:$0xf]
    %v137 = vunpack.c.l.b16 %v57
    %v138 = vunpack.c.l.b16 %v58
    %v139 = vunpack.c.l.b16 %v59
    %v140 = vunpack.c.l.b16 %v60
    %v141 = vunpack.c.l.b16 %v61
    %v142 = vunpack.c.l.b16 %v62
    %v143 = vunpack.c.l.b16 %v63
    %v144 = vunpack.c.l.b16 %v64
    %v145 = vunpack.c.l.b16 %v65
    %v146 = vunpack.c.l.b16 %v66
    %v147 = vunpack.c.l.b16 %v67
    %v148 = vunpack.c.l.b16 %v68
    %v149 = vunpack.c.l.b16 %v69
    %v150 = vunpack.c.l.b16 %v70
    %v151 = vunpack.c.l.b16 %v71
    %v152 = vunpack.c.l.b16 %v72
    %v153 = vunpack.c.l.b16 %v73
    %v154 = vunpack.c.l.b16 %v74
    %v155 = vunpack.c.l.b16 %v75
    %v156 = vunpack.c.l.b16 %v76
    %v157 = vunpack.c.l.b16 %v77
    %v158 = vunpack.c.l.b16 %v78
    %v159 = vunpack.c.l.b16 %v79
    %v160 = vunpack.c.l.b16 %v80
    %v161 = vunpack.c.l.b16 %v81
    %v162 = vunpack.c.l.b16 %v82
    %v163 = vunpack.c.l.b16 %v83
    %v164 = vunpack.c.l.b16 %v84
    %v165 = vunpack.c.l.b16 %v85
    %v166 = vunpack.c.l.b16 %v86
    %v167 = vunpack.c.l.b16 %v87
    %v168 = vunpack.c.l.b16 %v88
    %v169 = vpack.c.b16 %v138, %v137
    %v170 = vpack.c.b16 %v140, %v139
    %v171 = vpack.c.b16 %v142, %v141
    %v172 = vpack.c.b16 %v144, %v143
    %v173 = vpack.c.b16 %v146, %v145
    %v174 = vpack.c.b16 %v148, %v147
    %v175 = vpack.c.b16 %v150, %v149
    %v176 = vpack.c.b16 %v152, %v151
    %v177 = vpack.c.b16 %v154, %v153
    %v178 = vpack.c.b16 %v156, %v155
    %v179 = vpack.c.b16 %v158, %v157
    %v180 = vpack.c.b16 %v160, %v159
    %v181 = vpack.c.b16 %v162, %v161
    %v182 = vpack.c.b16 %v164, %v163
    %v183 = vpack.c.b16 %v166, %v165
    %v184 = vpack.c.b16 %v168, %v167
    %v217 = vunpack.c.l.b16 %v89
    %v218 = vunpack.c.l.b16 %v90
    %v219 = vunpack.c.l.b16 %v91
    %v220 = vunpack.c.l.b16 %v92
    %v221 = vunpack.c.l.b16 %v93
    %v222 = vunpack.c.l.b16 %v94
    %v223 = vunpack.c.l.b16 %v95
    %v224 = vunpack.c.l.b16 %v96
    %v225 = vunpack.c.l.b16 %v97
    %v226 = vunpack.c.l.b16 %v98
    %v227 = vunpack.c.l.b16 %v99
    %v228 = vunpack.c.l.b16 %v100
    %v229 = vunpack.c.l.b16 %v101
    %v230 = vunpack.c.l.b16 %v102
    %v231 = vunpack.c.l.b16 %v103
    %v232 = vunpack.c.l.b16 %v104
    %v233 = vpack.c.b16 %v218, %v217
    %v234 = vpack.c.b16 %v220, %v219
    %v235 = vpack.c.b16 %v222, %v221
    %v236 = vpack.c.b16 %v224, %v223
    %v237 = vpack.c.b16 %v226, %v225
    %v238 = vpack.c.b16 %v228, %v227
    %v239 = vpack.c.b16 %v230, %v229
    %v240 = vpack.c.b16 %v232, %v231
    %249 = vmatprep.subr.bf16.mxu0 0
    %250 = vmatpush1.bf16.msra.mxu0 %v233
    %251 = vmatprep.subr.bf16.mxu0 0
    %252 = vmatpush1.bf16.msra.mxu0 %v234
    %253 = vmatprep.subr.bf16.mxu0 0
    %254 = vmatpush1.bf16.msra.mxu0 %v235
    %255 = vmatprep.subr.bf16.mxu0 0
    %256 = vmatpush1.bf16.msra.mxu0 %v236
    %257 = vmatprep.subr.bf16.mxu0 0
    %258 = vmatpush1.bf16.msra.mxu0 %v237
    %259 = vmatprep.subr.bf16.mxu0 0
    %260 = vmatpush1.bf16.msra.mxu0 %v238
    %261 = vmatprep.subr.bf16.mxu0 0
    %262 = vmatpush1.bf16.msra.mxu0 %v239
    %263 = vmatprep.subr.bf16.mxu0 0
    %264 = vmatpush1.bf16.msra.mxu0 %v240
    %265 = vmatprep.subr.bf16.mxu0 0
    %266 = vmatpush1.bf16.msra.mxu0 0
    %267 = vmatprep.subr.bf16.mxu0 0
    %268 = vmatpush1.bf16.msra.mxu0 0
    %269 = vmatprep.subr.bf16.mxu0 0
    %270 = vmatpush1.bf16.msra.mxu0 0
    %271 = vmatprep.subr.bf16.mxu0 0
    %272 = vmatpush1.bf16.msra.mxu0 0
    %273 = vmatprep.subr.bf16.mxu0 0
    %274 = vmatpush1.bf16.msra.mxu0 0
    %275 = vmatprep.subr.bf16.mxu0 0
    %276 = vmatpush1.bf16.msra.mxu0 0
    %277 = vmatprep.subr.bf16.mxu0 0
    %278 = vmatpush1.bf16.msra.mxu0 0
    %279 = vmatprep.subr.bf16.mxu0 0
    %280 = vmatpush1.bf16.msra.mxu0 0
    %281 = vmatprep.mubr.bf16.mxu0 0
    %282 = vmatmul.mubr.bf16.gmra.mrb[0].mxu0 %v169
    %v283 = vpop.f32.mrb[0].mxu0
    %v284 = vadd.f32 0.0, %v283
    %v285 = vpop.f32.mrb[0].mxu0
    %v286 = vpop.f32.mrb[0].mxu0
    %v287 = vadd.f32 0.0, %v286
    %v288 = vpop.f32.mrb[0].mxu0
    %289 = vmatprep.mubr.bf16.mxu0 0
    %290 = vmatmul.mubr.bf16.gmra.mrb[0].mxu0 %v170
    %v291 = vpop.f32.mrb[0].mxu0
    %v292 = vadd.f32 0.0, %v291
    %v293 = vpop.f32.mrb[0].mxu0
    %v294 = vpop.f32.mrb[0].mxu0
    %v295 = vadd.f32 0.0, %v294
    %v296 = vpop.f32.mrb[0].mxu0
    %297 = vmatprep.mubr.bf16.mxu0 0
    %298 = vmatmul.mubr.bf16.gmra.mrb[0].mxu0 %v171
    %v299 = vpop.f32.mrb[0].mxu0
    %v300 = vadd.f32 0.0, %v299
    %v301 = vpop.f32.mrb[0].mxu0
    %v302 = vpop.f32.mrb[0].mxu0
    %v303 = vadd.f32 0.0, %v302
    %v304 = vpop.f32.mrb[0].mxu0
    %305 = vmatprep.mubr.bf16.mxu0 0
    %306 = vmatmul.mubr.bf16.gmra.mrb[0].mxu0 %v172
    %v307 = vpop.f32.mrb[0].mxu0
    %v308 = vadd.f32 0.0, %v307
    %v309 = vpop.f32.mrb[0].mxu0
    %v310 = vpop.f32.mrb[0].mxu0
    %v311 = vadd.f32 0.0, %v310
    %v312 = vpop.f32.mrb[0].mxu0
    %313 = vmatprep.mubr.bf16.mxu0 0
    %314 = vmatmul.mubr.bf16.gmra.mrb[0].mxu0 %v173
    %v315 = vpop.f32.mrb[0].mxu0
    %v316 = vadd.f32 0.0, %v315
    %v317 = vpop.f32.mrb[0].mxu0
    %v318 = vpop.f32.mrb[0].mxu0
    %v319 = vadd.f32 0.0, %v318
    %v320 = vpop.f32.mrb[0].mxu0
    %321 = vmatprep.mubr.bf16.mxu0 0
    %322 = vmatmul.mubr.bf16.gmra.mrb[0].mxu0 %v174
    %v323 = vpop.f32.mrb[0].mxu0
    %v324 = vadd.f32 0.0, %v323
    %v325 = vpop.f32.mrb[0].mxu0
    %v326 = vpop.f32.mrb[0].mxu0
    %v327 = vadd.f32 0.0, %v326
    %v328 = vpop.f32.mrb[0].mxu0
    %329 = vmatprep.mubr.bf16.mxu0 0
    %330 = vmatmul.mubr.bf16.gmra.mrb[0].mxu0 %v175
    %v331 = vpop.f32.mrb[0].mxu0
    %v332 = vadd.f32 0.0, %v331
    %v333 = vpop.f32.mrb[0].mxu0
    %v334 = vpop.f32.mrb[0].mxu0
    %v335 = vadd.f32 0.0, %v334
    %v336 = vpop.f32.mrb[0].mxu0
    %337 = vmatprep.mubr.bf16.mxu0 0
    %338 = vmatmul.mubr.bf16.gmra.mrb[0].mxu0 %v176
    %v339 = vpop.f32.mrb[0].mxu0
    %v340 = vadd.f32 0.0, %v339
    %v341 = vpop.f32.mrb[0].mxu0
    %v342 = vpop.f32.mrb[0].mxu0
    %v343 = vadd.f32 0.0, %v342
    %v344 = vpop.f32.mrb[0].mxu0
    %345 = vmatprep.mubr.bf16.mxu0 0
    %346 = vmatmul.mubr.bf16.gmra.mrb[0].mxu0 %v177
    %v347 = vpop.f32.mrb[0].mxu0
    %v348 = vadd.f32 0.0, %v347
    %v349 = vpop.f32.mrb[0].mxu0
    %v350 = vpop.f32.mrb[0].mxu0
    %v351 = vadd.f32 0.0, %v350
    %v352 = vpop.f32.mrb[0].mxu0
    %353 = vmatprep.mubr.bf16.mxu0 0
    %354 = vmatmul.mubr.bf16.gmra.mrb[0].mxu0 %v178
    %v355 = vpop.f32.mrb[0].mxu0
    %v356 = vadd.f32 0.0, %v355
    %v357 = vpop.f32.mrb[0].mxu0
    %v358 = vpop.f32.mrb[0].mxu0
    %v359 = vadd.f32 0.0, %v358
    %v360 = vpop.f32.mrb[0].mxu0
    %361 = vmatprep.mubr.bf16.mxu0 0
    %362 = vmatmul.mubr.bf16.gmra.mrb[0].mxu0 %v179
    %v363 = vpop.f32.mrb[0].mxu0
    %v364 = vadd.f32 0.0, %v363
    %v365 = vpop.f32.mrb[0].mxu0
    %v366 = vpop.f32.mrb[0].mxu0
    %v367 = vadd.f32 0.0, %v366
    %v368 = vpop.f32.mrb[0].mxu0
    %369 = vmatprep.mubr.bf16.mxu0 0
    %370 = vmatmul.mubr.bf16.gmra.mrb[0].mxu0 %v180
    %v371 = vpop.f32.mrb[0].mxu0
    %v372 = vadd.f32 0.0, %v371
    %v373 = vpop.f32.mrb[0].mxu0
    %v374 = vpop.f32.mrb[0].mxu0
    %v375 = vadd.f32 0.0, %v374
    %v376 = vpop.f32.mrb[0].mxu0
    %377 = vmatprep.mubr.bf16.mxu0 0
    %378 = vmatmul.mubr.bf16.gmra.mrb[0].mxu0 %v181
    %v379 = vpop.f32.mrb[0].mxu0
    %v380 = vadd.f32 0.0, %v379
    %v381 = vpop.f32.mrb[0].mxu0
    %v382 = vpop.f32.mrb[0].mxu0
    %v383 = vadd.f32 0.0, %v382
    %v384 = vpop.f32.mrb[0].mxu0
    %385 = vmatprep.mubr.bf16.mxu0 0
    %386 = vmatmul.mubr.bf16.gmra.mrb[0].mxu0 %v182
    %v387 = vpop.f32.mrb[0].mxu0
    %v388 = vadd.f32 0.0, %v387
    %v389 = vpop.f32.mrb[0].mxu0
    %v390 = vpop.f32.mrb[0].mxu0
    %v391 = vadd.f32 0.0, %v390
    %v392 = vpop.f32.mrb[0].mxu0
    %393 = vmatprep.mubr.bf16.mxu0 0
    %394 = vmatmul.mubr.bf16.gmra.mrb[0].mxu0 %v183
    %v395 = vpop.f32.mrb[0].mxu0
    %v396 = vadd.f32 0.0, %v395
    %v397 = vpop.f32.mrb[0].mxu0
    %v398 = vpop.f32.mrb[0].mxu0
    %v399 = vadd.f32 0.0, %v398
    %v400 = vpop.f32.mrb[0].mxu0
    %401 = vmatprep.mubr.bf16.mxu0 0
    %402 = vmatmul.mubr.bf16.gmra.mrb[0].mxu0 %v184
    %v403 = vpop.f32.mrb[0].mxu0
    %v404 = vadd.f32 0.0, %v403
    %v405 = vpop.f32.mrb[0].mxu0
    %v406 = vpop.f32.mrb[0].mxu0
    %v407 = vadd.f32 0.0, %v406
    %v408 = vpop.f32.mrb[0].mxu0
    %409 = vdwg.mxu0
    %v410 = vmax.f32 %v284, 0.0
    %v411 = vmax.f32 %v287, 0.0
    %v412 = vmax.f32 %v292, 0.0
    %v413 = vmax.f32 %v295, 0.0
    %v414 = vmax.f32 %v300, 0.0
    %v415 = vmax.f32 %v303, 0.0
    %v416 = vmax.f32 %v308, 0.0
    %v417 = vmax.f32 %v311, 0.0
    %v418 = vmax.f32 %v316, 0.0
    %v419 = vmax.f32 %v319, 0.0
    %v420 = vmax.f32 %v324, 0.0
    %v421 = vmax.f32 %v327, 0.0
    %v422 = vmax.f32 %v332, 0.0
    %v423 = vmax.f32 %v335, 0.0
    %v424 = vmax.f32 %v340, 0.0
    %v425 = vmax.f32 %v343, 0.0
    %v426 = vmax.f32 %v348, 0.0
    %v427 = vmax.f32 %v351, 0.0
    %v428 = vmax.f32 %v356, 0.0
    %v429 = vmax.f32 %v359, 0.0
    %v430 = vmax.f32 %v364, 0.0
    %v431 = vmax.f32 %v367, 0.0
    %v432 = vmax.f32 %v372, 0.0
    %v433 = vmax.f32 %v375, 0.0
    %v434 = vmax.f32 %v380, 0.0
    %v435 = vmax.f32 %v383, 0.0
    %v436 = vmax.f32 %v388, 0.0
    %v437 = vmax.f32 %v391, 0.0
    %v438 = vmax.f32 %v396, 0.0
    %v439 = vmax.f32 %v399, 0.0
    %v440 = vmax.f32 %v404, 0.0
    %v441 = vmax.f32 %v407, 0.0
    %v442 = vpack.c.bf16 %v411, %v410
    %v443 = vpack.c.bf16 %v413, %v412
    %v444 = vpack.c.bf16 %v415, %v414
    %v445 = vpack.c.bf16 %v417, %v416
    %v446 = vpack.c.bf16 %v419, %v418
    %v447 = vpack.c.bf16 %v421, %v420
    %v448 = vpack.c.bf16 %v423, %v422
    %v449 = vpack.c.bf16 %v425, %v424
    %v450 = vpack.c.bf16 %v427, %v426
    %v451 = vpack.c.bf16 %v429, %v428
    %v452 = vpack.c.bf16 %v431, %v430
    %v453 = vpack.c.bf16 %v433, %v432
    %v454 = vpack.c.bf16 %v435, %v434
    %v455 = vpack.c.bf16 %v437, %v436
    %v456 = vpack.c.bf16 %v439, %v438
    %v457 = vpack.c.bf16 %v441, %v440
    %v458 = vld [vmem:[#allocation7] sm:$0xf]
    %v459 = vld [vmem:[#allocation7 + $0x4] sm:$0xf]
    %v460 = vld [vmem:[#allocation7 + $0x8] sm:$0xf]
    %v461 = vld [vmem:[#allocation7 + $0xc] sm:$0xf]
    %v462 = vld [vmem:[#allocation7 + $0x10] sm:$0xf]
    %v463 = vld [vmem:[#allocation7 + $0x14] sm:$0xf]
    %v464 = vld [vmem:[#allocation7 + $0x18] sm:$0xf]
    %v465 = vld [vmem:[#allocation7 + $0x1c] sm:$0xf]
    %v466 = vld [vmem:[#allocation7 + $0x20] sm:$0xf]
    %v467 = vld [vmem:[#allocation7 + $0x24] sm:$0xf]
    %v468 = vld [vmem:[#allocation7 + $0x28] sm:$0xf]
    %v469 = vld [vmem:[#allocation7 + $0x2c] sm:$0xf]
    %v470 = vld [vmem:[#allocation7 + $0x30] sm:$0xf]
    %v471 = vld [vmem:[#allocation7 + $0x34] sm:$0xf]
    %v472 = vld [vmem:[#allocation7 + $0x38] sm:$0xf]
    %v473 = vld [vmem:[#allocation7 + $0x3c] sm:$0xf]
    %v474 = vunpack.c.l.bf16 %v57
    %v475 = vunpack.c.l.bf16 %v58
    %v476 = vunpack.c.l.bf16 %v59
    %v477 = vunpack.c.l.bf16 %v60
    %v478 = vunpack.c.l.bf16 %v61
    %v479 = vunpack.c.l.bf16 %v62
    %v480 = vunpack.c.l.bf16 %v63
    %v481 = vunpack.c.l.bf16 %v64
    %v482 = vunpack.c.l.bf16 %v65
    %v483 = vunpack.c.l.bf16 %v66
    %v484 = vunpack.c.l.bf16 %v67
    %v485 = vunpack.c.l.bf16 %v68
    %v486 = vunpack.c.l.bf16 %v69
    %v487 = vunpack.c.l.bf16 %v70
    %v488 = vunpack.c.l.bf16 %v71
    %v489 = vunpack.c.l.bf16 %v72
    %v490 = vunpack.c.l.bf16 %v73
    %v491 = vunpack.c.l.bf16 %v74
    %v492 = vunpack.c.l.bf16 %v75
    %v493 = vunpack.c.l.bf16 %v76
    %v494 = vunpack.c.l.bf16 %v77
    %v495 = vunpack.c.l.bf16 %v78
    %v496 = vunpack.c.l.bf16 %v79
    %v497 = vunpack.c.l.bf16 %v80
    %v498 = vunpack.c.l.bf16 %v81
    %v499 = vunpack.c.l.bf16 %v82
    %v500 = vunpack.c.l.bf16 %v83
    %v501 = vunpack.c.l.bf16 %v84
    %v502 = vunpack.c.l.bf16 %v85
    %v503 = vunpack.c.l.bf16 %v86
    %v504 = vunpack.c.l.bf16 %v87
    %v505 = vunpack.c.l.bf16 %v88
    %v522 = vunpack.c.l.b16 %v458
    %v523 = vunpack.c.l.b16 %v459
    %v524 = vunpack.c.l.b16 %v460
    %v525 = vunpack.c.l.b16 %v461
    %v526 = vunpack.c.l.b16 %v462
    %v527 = vunpack.c.l.b16 %v463
    %v528 = vunpack.c.l.b16 %v464
    %v529 = vunpack.c.l.b16 %v465
    %v530 = vunpack.c.l.b16 %v466
    %v531 = vunpack.c.l.b16 %v467
    %v532 = vunpack.c.l.b16 %v468
    %v533 = vunpack.c.l.b16 %v469
    %v534 = vunpack.c.l.b16 %v470
    %v535 = vunpack.c.l.b16 %v471
    %v536 = vunpack.c.l.b16 %v472
    %v537 = vunpack.c.l.b16 %v473
    %v538 = vpack.c.b16 %v523, %v522
    %v539 = vpack.c.b16 %v525, %v524
    %v540 = vpack.c.b16 %v527, %v526
    %v541 = vpack.c.b16 %v529, %v528
    %v542 = vpack.c.b16 %v531, %v530
    %v543 = vpack.c.b16 %v533, %v532
    %v544 = vpack.c.b16 %v535, %v534
    %v545 = vpack.c.b16 %v537, %v536
    %554 = vmatprep.subr.bf16.mxu0 0
    %555 = vmatpush1.bf16.msra.mxu0 %v538
    %556 = vmatprep.subr.bf16.mxu0 0
    %557 = vmatpush1.bf16.msra.mxu0 %v539
    %558 = vmatprep.subr.bf16.mxu0 0
    %559 = vmatpush1.bf16.msra.mxu0 %v540
    %560 = vmatprep.subr.bf16.mxu0 0
    %561 = vmatpush1.bf16.msra.mxu0 %v541
    %562 = vmatprep.subr.bf16.mxu0 0
    %563 = vmatpush1.bf16.msra.mxu0 %v542
    %564 = vmatprep.subr.bf16.mxu0 0
    %565 = vmatpush1.bf16.msra.mxu0 %v543
    %566 = vmatprep.subr.bf16.mxu0 0
    %567 = vmatpush1.bf16.msra.mxu0 %v544
    %568 = vmatprep.subr.bf16.mxu0 0
    %569 = vmatpush1.bf16.msra.mxu0 %v545
    %570 = vmatprep.subr.bf16.mxu0 0
    %571 = vmatpush1.bf16.msra.mxu0 0
    %572 = vmatprep.subr.bf16.mxu0 0
    %573 = vmatpush1.bf16.msra.mxu0 0
    %574 = vmatprep.subr.bf16.mxu0 0
    %575 = vmatpush1.bf16.msra.mxu0 0
    %576 = vmatprep.subr.bf16.mxu0 0
    %577 = vmatpush1.bf16.msra.mxu0 0
    %578 = vmatprep.subr.bf16.mxu0 0
    %579 = vmatpush1.bf16.msra.mxu0 0
    %580 = vmatprep.subr.bf16.mxu0 0
    %581 = vmatpush1.bf16.msra.mxu0 0
    %582 = vmatprep.subr.bf16.mxu0 0
    %583 = vmatpush1.bf16.msra.mxu0 0
    %584 = vmatprep.subr.bf16.mxu0 0
    %585 = vmatpush1.bf16.msra.mxu0 0
    %586 = vmatprep.mubr.bf16.mxu0 0
    %587 = vmatmul.mubr.bf16.gmra.mrb[0].mxu0 %v442
    %v588 = vpop.f32.mrb[0].mxu0
    %v589 = vadd.f32 %v474, %v588
    %v590 = vpop.f32.mrb[0].mxu0
    %v591 = vpop.f32.mrb[0].mxu0
    %v592 = vadd.f32 %v475, %v591
    %v593 = vpop.f32.mrb[0].mxu0
    %594 = vmatprep.mubr.bf16.mxu0 0
    %595 = vmatmul.mubr.bf16.gmra.mrb[0].mxu0 %v443
    %v596 = vpop.f32.mrb[0].mxu0
    %v597 = vadd.f32 %v476, %v596
    %v598 = vpop.f32.mrb[0].mxu0
    %v599 = vpop.f32.mrb[0].mxu0
    %v600 = vadd.f32 %v477, %v599
    %v601 = vpop.f32.mrb[0].mxu0
    %602 = vmatprep.mubr.bf16.mxu0 0
    %603 = vmatmul.mubr.bf16.gmra.mrb[0].mxu0 %v444
    %v604 = vpop.f32.mrb[0].mxu0
    %v605 = vadd.f32 %v478, %v604
    %v606 = vpop.f32.mrb[0].mxu0
    %v607 = vpop.f32.mrb[0].mxu0
    %v608 = vadd.f32 %v479, %v607
    %v609 = vpop.f32.mrb[0].mxu0
    %610 = vmatprep.mubr.bf16.mxu0 0
    %611 = vmatmul.mubr.bf16.gmra.mrb[0].mxu0 %v445
    %v612 = vpop.f32.mrb[0].mxu0
    %v613 = vadd.f32 %v480, %v612
    %v614 = vpop.f32.mrb[0].mxu0
    %v615 = vpop.f32.mrb[0].mxu0
    %v616 = vadd.f32 %v481, %v615
    %v617 = vpop.f32.mrb[0].mxu0
    %618 = vmatprep.mubr.bf16.mxu0 0
    %619 = vmatmul.mubr.bf16.gmra.mrb[0].mxu0 %v446
    %v620 = vpop.f32.mrb[0].mxu0
    %v621 = vadd.f32 %v482, %v620
    %v622 = vpop.f32.mrb[0].mxu0
    %v623 = vpop.f32.mrb[0].mxu0
    %v624 = vadd.f32 %v483, %v623
    %v625 = vpop.f32.mrb[0].mxu0
    %626 = vmatprep.mubr.bf16.mxu0 0
    %627 = vmatmul.mubr.bf16.gmra.mrb[0].mxu0 %v447
    %v628 = vpop.f32.mrb[0].mxu0
    %v629 = vadd.f32 %v484, %v628
    %v630 = vpop.f32.mrb[0].mxu0
    %v631 = vpop.f32.mrb[0].mxu0
    %v632 = vadd.f32 %v485, %v631
    %v633 = vpop.f32.mrb[0].mxu0
    %634 = vmatprep.mubr.bf16.mxu0 0
    %635 = vmatmul.mubr.bf16.gmra.mrb[0].mxu0 %v448
    %v636 = vpop.f32.mrb[0].mxu0
    %v637 = vadd.f32 %v486, %v636
    %v638 = vpop.f32.mrb[0].mxu0
    %v639 = vpop.f32.mrb[0].mxu0
    %v640 = vadd.f32 %v487, %v639
    %v641 = vpop.f32.mrb[0].mxu0
    %642 = vmatprep.mubr.bf16.mxu0 0
    %643 = vmatmul.mubr.bf16.gmra.mrb[0].mxu0 %v449
    %v644 = vpop.f32.mrb[0].mxu0
    %v645 = vadd.f32 %v488, %v644
    %v646 = vpop.f32.mrb[0].mxu0
    %v647 = vpop.f32.mrb[0].mxu0
    %v648 = vadd.f32 %v489, %v647
    %v649 = vpop.f32.mrb[0].mxu0
    %650 = vmatprep.mubr.bf16.mxu0 0
    %651 = vmatmul.mubr.bf16.gmra.mrb[0].mxu0 %v450
    %v652 = vpop.f32.mrb[0].mxu0
    %v653 = vadd.f32 %v490, %v652
    %v654 = vpop.f32.mrb[0].mxu0
    %v655 = vpop.f32.mrb[0].mxu0
    %v656 = vadd.f32 %v491, %v655
    %v657 = vpop.f32.mrb[0].mxu0
    %658 = vmatprep.mubr.bf16.mxu0 0
    %659 = vmatmul.mubr.bf16.gmra.mrb[0].mxu0 %v451
    %v660 = vpop.f32.mrb[0].mxu0
    %v661 = vadd.f32 %v492, %v660
    %v662 = vpop.f32.mrb[0].mxu0
    %v663 = vpop.f32.mrb[0].mxu0
    %v664 = vadd.f32 %v493, %v663
    %v665 = vpop.f32.mrb[0].mxu0
    %666 = vmatprep.mubr.bf16.mxu0 0
    %667 = vmatmul.mubr.bf16.gmra.mrb[0].mxu0 %v452
    %v668 = vpop.f32.mrb[0].mxu0
    %v669 = vadd.f32 %v494, %v668
    %v670 = vpop.f32.mrb[0].mxu0
    %v671 = vpop.f32.mrb[0].mxu0
    %v672 = vadd.f32 %v495, %v671
    %v673 = vpop.f32.mrb[0].mxu0
    %674 = vmatprep.mubr.bf16.mxu0 0
    %675 = vmatmul.mubr.bf16.gmra.mrb[0].mxu0 %v453
    %v676 = vpop.f32.mrb[0].mxu0
    %v677 = vadd.f32 %v496, %v676
    %v678 = vpop.f32.mrb[0].mxu0
    %v679 = vpop.f32.mrb[0].mxu0
    %v680 = vadd.f32 %v497, %v679
    %v681 = vpop.f32.mrb[0].mxu0
    %682 = vmatprep.mubr.bf16.mxu0 0
    %683 = vmatmul.mubr.bf16.gmra.mrb[0].mxu0 %v454
    %v684 = vpop.f32.mrb[0].mxu0
    %v685 = vadd.f32 %v498, %v684
    %v686 = vpop.f32.mrb[0].mxu0
    %v687 = vpop.f32.mrb[0].mxu0
    %v688 = vadd.f32 %v499, %v687
    %v689 = vpop.f32.mrb[0].mxu0
    %690 = vmatprep.mubr.bf16.mxu0 0
    %691 = vmatmul.mubr.bf16.gmra.mrb[0].mxu0 %v455
    %v692 = vpop.f32.mrb[0].mxu0
    %v693 = vadd.f32 %v500, %v692
    %v694 = vpop.f32.mrb[0].mxu0
    %v695 = vpop.f32.mrb[0].mxu0
    %v696 = vadd.f32 %v501, %v695
    %v697 = vpop.f32.mrb[0].mxu0
    %698 = vmatprep.mubr.bf16.mxu0 0
    %699 = vmatmul.mubr.bf16.gmra.mrb[0].mxu0 %v456
    %v700 = vpop.f32.mrb[0].mxu0
    %v701 = vadd.f32 %v502, %v700
    %v702 = vpop.f32.mrb[0].mxu0
    %v703 = vpop.f32.mrb[0].mxu0
    %v704 = vadd.f32 %v503, %v703
    %v705 = vpop.f32.mrb[0].mxu0
    %706 = vmatprep.mubr.bf16.mxu0 0
    %707 = vmatmul.mubr.bf16.gmra.mrb[0].mxu0 %v457
    %v708 = vpop.f32.mrb[0].mxu0
    %v709 = vadd.f32 %v504, %v708
    %v710 = vpop.f32.mrb[0].mxu0
    %v711 = vpop.f32.mrb[0].mxu0
    %v712 = vadd.f32 %v505, %v711
    %v713 = vpop.f32.mrb[0].mxu0
    %714 = vdwg.mxu0
    %715 = vadd.xlane.f32.xlu0 %v589
    %v716 = vpop.xlane.xlu0 %715
    %717 = vadd.xlane.f32.xlu0 %v592
    %v718 = vpop.xlane.xlu0 %717
    %719 = vadd.xlane.f32.xlu0 %v597
    %v720 = vpop.xlane.xlu0 %719
    %721 = vadd.xlane.f32.xlu0 %v600
    %v722 = vpop.xlane.xlu0 %721
    %723 = vadd.xlane.f32.xlu0 %v605
    %v724 = vpop.xlane.xlu0 %723
    %725 = vadd.xlane.f32.xlu0 %v608
    %v726 = vpop.xlane.xlu0 %725
    %727 = vadd.xlane.f32.xlu0 %v613
    %v728 = vpop.xlane.xlu0 %727
    %729 = vadd.xlane.f32.xlu0 %v616
    %v730 = vpop.xlane.xlu0 %729
    %731 = vadd.xlane.f32.xlu0 %v621
    %v732 = vpop.xlane.xlu0 %731
    %733 = vadd.xlane.f32.xlu0 %v624
    %v734 = vpop.xlane.xlu0 %733
    %735 = vadd.xlane.f32.xlu0 %v629
    %v736 = vpop.xlane.xlu0 %735
    %737 = vadd.xlane.f32.xlu0 %v632
    %v738 = vpop.xlane.xlu0 %737
    %739 = vadd.xlane.f32.xlu0 %v637
    %v740 = vpop.xlane.xlu0 %739
    %741 = vadd.xlane.f32.xlu0 %v640
    %v742 = vpop.xlane.xlu0 %741
    %743 = vadd.xlane.f32.xlu0 %v645
    %v744 = vpop.xlane.xlu0 %743
    %745 = vadd.xlane.f32.xlu0 %v648
    %v746 = vpop.xlane.xlu0 %745
    %747 = vadd.xlane.f32.xlu0 %v653
    %v748 = vpop.xlane.xlu0 %747
    %749 = vadd.xlane.f32.xlu0 %v656
    %v750 = vpop.xlane.xlu0 %749
    %751 = vadd.xlane.f32.xlu0 %v661
    %v752 = vpop.xlane.xlu0 %751
    %753 = vadd.xlane.f32.xlu0 %v664
    %v754 = vpop.xlane.xlu0 %753
    %755 = vadd.xlane.f32.xlu0 %v669
    %v756 = vpop.xlane.xlu0 %755
    %757 = vadd.xlane.f32.xlu0 %v672
    %v758 = vpop.xlane.xlu0 %757
    %759 = vadd.xlane.f32.xlu0 %v677
    %v760 = vpop.xlane.xlu0 %759
    %761 = vadd.xlane.f32.xlu0 %v680
    %v762 = vpop.xlane.xlu0 %761
    %763 = vadd.xlane.f32.xlu0 %v685
    %v764 = vpop.xlane.xlu0 %763
    %765 = vadd.xlane.f32.xlu0 %v688
    %v766 = vpop.xlane.xlu0 %765
    %767 = vadd.xlane.f32.xlu0 %v693
    %v768 = vpop.xlane.xlu0 %767
    %769 = vadd.xlane.f32.xlu0 %v696
    %v770 = vpop.xlane.xlu0 %769
    %771 = vadd.xlane.f32.xlu0 %v701
    %v772 = vpop.xlane.xlu0 %771
    %773 = vadd.xlane.f32.xlu0 %v704
    %v774 = vpop.xlane.xlu0 %773
    %775 = vadd.xlane.f32.xlu0 %v709
    %v776 = vpop.xlane.xlu0 %775
    %777 = vadd.xlane.f32.xlu0 %v712
    %v778 = vpop.xlane.xlu0 %777
    %v779 = vmul.f32 %v716, 0.03125
    %v780 = vmul.f32 %v718, 0.03125
    %v781 = vmul.f32 %v720, 0.03125
    %v782 = vmul.f32 %v722, 0.03125
    %v783 = vmul.f32 %v724, 0.03125
    %v784 = vmul.f32 %v726, 0.03125
    %v785 = vmul.f32 %v728, 0.03125
    %v786 = vmul.f32 %v730, 0.03125
    %v787 = vmul.f32 %v732, 0.03125
    %v788 = vmul.f32 %v734, 0.03125
    %v789 = vmul.f32 %v736, 0.03125
    %v790 = vmul.f32 %v738, 0.03125
    %v791 = vmul.f32 %v740, 0.03125
    %v792 = vmul.f32 %v742, 0.03125
    %v793 = vmul.f32 %v744, 0.03125
    %v794 = vmul.f32 %v746, 0.03125
    %v795 = vmul.f32 %v748, 0.03125
    %v796 = vmul.f32 %v750, 0.03125
    %v797 = vmul.f32 %v752, 0.03125
    %v798 = vmul.f32 %v754, 0.03125
    %v799 = vmul.f32 %v756, 0.03125
    %v800 = vmul.f32 %v758, 0.03125
    %v801 = vmul.f32 %v760, 0.03125
    %v802 = vmul.f32 %v762, 0.03125
    %v803 = vmul.f32 %v764, 0.03125
    %v804 = vmul.f32 %v766, 0.03125
    %v805 = vmul.f32 %v768, 0.03125
    %v806 = vmul.f32 %v770, 0.03125
    %v807 = vmul.f32 %v772, 0.03125
    %v808 = vmul.f32 %v774, 0.03125
    %v809 = vmul.f32 %v776, 0.03125
    %v810 = vmul.f32 %v778, 0.03125
    %v811 = vmul.f32 %v589, %v589
    %v812 = vmul.f32 %v592, %v592
    %v813 = vmul.f32 %v597, %v597
    %v814 = vmul.f32 %v600, %v600
    %v815 = vmul.f32 %v605, %v605
    %v816 = vmul.f32 %v608, %v608
    %v817 = vmul.f32 %v613, %v613
    %v818 = vmul.f32 %v616, %v616
    %v819 = vmul.f32 %v621, %v621
    %v820 = vmul.f32 %v624, %v624
    %v821 = vmul.f32 %v629, %v629
    %v822 = vmul.f32 %v632, %v632
    %v823 = vmul.f32 %v637, %v637
    %v824 = vmul.f32 %v640, %v640
    %v825 = vmul.f32 %v645, %v645
    %v826 = vmul.f32 %v648, %v648
    %v827 = vmul.f32 %v653, %v653
    %v828 = vmul.f32 %v656, %v656
    %v829 = vmul.f32 %v661, %v661
    %v830 = vmul.f32 %v664, %v664
    %v831 = vmul.f32 %v669, %v669
    %v832 = vmul.f32 %v672, %v672
    %v833 = vmul.f32 %v677, %v677
    %v834 = vmul.f32 %v680, %v680
    %v835 = vmul.f32 %v685, %v685
    %v836 = vmul.f32 %v688, %v688
    %v837 = vmul.f32 %v693, %v693
    %v838 = vmul.f32 %v696, %v696
    %v839 = vmul.f32 %v701, %v701
    %v840 = vmul.f32 %v704, %v704
    %v841 = vmul.f32 %v709, %v709
    %v842 = vmul.f32 %v712, %v712
    %843 = vadd.xlane.f32.xlu0 %v811
    %v844 = vpop.xlane.xlu0 %843
    %845 = vadd.xlane.f32.xlu0 %v812
    %v846 = vpop.xlane.xlu0 %845
    %847 = vadd.xlane.f32.xlu0 %v813
    %v848 = vpop.xlane.xlu0 %847
    %849 = vadd.xlane.f32.xlu0 %v814
    %v850 = vpop.xlane.xlu0 %849
    %851 = vadd.xlane.f32.xlu0 %v815
    %v852 = vpop.xlane.xlu0 %851
    %853 = vadd.xlane.f32.xlu0 %v816
    %v854 = vpop.xlane.xlu0 %853
    %855 = vadd.xlane.f32.xlu0 %v817
    %v856 = vpop.xlane.xlu0 %855
    %857 = vadd.xlane.f32.xlu0 %v818
    %v858 = vpop.xlane.xlu0 %857
    %859 = vadd.xlane.f32.xlu0 %v819
    %v860 = vpop.xlane.xlu0 %859
    %861 = vadd.xlane.f32.xlu0 %v820
    %v862 = vpop.xlane.xlu0 %861
    %863 = vadd.xlane.f32.xlu0 %v821
    %v864 = vpop.xlane.xlu0 %863
    %865 = vadd.xlane.f32.xlu0 %v822
    %v866 = vpop.xlane.xlu0 %865
    %867 = vadd.xlane.f32.xlu0 %v823
    %v868 = vpop.xlane.xlu0 %867
    %869 = vadd.xlane.f32.xlu0 %v824
    %v870 = vpop.xlane.xlu0 %869
    %871 = vadd.xlane.f32.xlu0 %v825
    %v872 = vpop.xlane.xlu0 %871
    %873 = vadd.xlane.f32.xlu0 %v826
    %v874 = vpop.xlane.xlu0 %873
    %875 = vadd.xlane.f32.xlu0 %v827
    %v876 = vpop.xlane.xlu0 %875
    %877 = vadd.xlane.f32.xlu0 %v828
    %v878 = vpop.xlane.xlu0 %877
    %879 = vadd.xlane.f32.xlu0 %v829
    %v880 = vpop.xlane.xlu0 %879
    %881 = vadd.xlane.f32.xlu0 %v830
    %v882 = vpop.xlane.xlu0 %881
    %883 = vadd.xlane.f32.xlu0 %v831
    %v884 = vpop.xlane.xlu0 %883
    %885 = vadd.xlane.f32.xlu0 %v832
    %v886 = vpop.xlane.xlu0 %885
    %887 = vadd.xlane.f32.xlu0 %v833
    %v888 = vpop.xlane.xlu0 %887
    %889 = vadd.xlane.f32.xlu0 %v834
    %v890 = vpop.xlane.xlu0 %889
    %891 = vadd.xlane.f32.xlu0 %v835
    %v892 = vpop.xlane.xlu0 %891
    %893 = vadd.xlane.f32.xlu0 %v836
    %v894 = vpop.xlane.xlu0 %893
    %895 = vadd.xlane.f32.xlu0 %v837
    %v896 = vpop.xlane.xlu0 %895
    %897 = vadd.xlane.f32.xlu0 %v838
    %v898 = vpop.xlane.xlu0 %897
    %899 = vadd.xlane.f32.xlu0 %v839
    %v900 = vpop.xlane.xlu0 %899
    %901 = vadd.xlane.f32.xlu0 %v840
    %v902 = vpop.xlane.xlu0 %901
    %903 = vadd.xlane.f32.xlu0 %v841
    %v904 = vpop.xlane.xlu0 %903
    %905 = vadd.xlane.f32.xlu0 %v842
    %v906 = vpop.xlane.xlu0 %905
    %v907 = vmul.f32 %v844, 0.03125
    %v908 = vmul.f32 %v846, 0.03125
    %v909 = vmul.f32 %v848, 0.03125
    %v910 = vmul.f32 %v850, 0.03125
    %v911 = vmul.f32 %v852, 0.03125
    %v912 = vmul.f32 %v854, 0.03125
    %v913 = vmul.f32 %v856, 0.03125
    %v914 = vmul.f32 %v858, 0.03125
    %v915 = vmul.f32 %v860, 0.03125
    %v916 = vmul.f32 %v862, 0.03125
    %v917 = vmul.f32 %v864, 0.03125
    %v918 = vmul.f32 %v866, 0.03125
    %v919 = vmul.f32 %v868, 0.03125
    %v920 = vmul.f32 %v870, 0.03125
    %v921 = vmul.f32 %v872, 0.03125
    %v922 = vmul.f32 %v874, 0.03125
    %v923 = vmul.f32 %v876, 0.03125
    %v924 = vmul.f32 %v878, 0.03125
    %v925 = vmul.f32 %v880, 0.03125
    %v926 = vmul.f32 %v882, 0.03125
    %v927 = vmul.f32 %v884, 0.03125
    %v928 = vmul.f32 %v886, 0.03125
    %v929 = vmul.f32 %v888, 0.03125
    %v930 = vmul.f32 %v890, 0.03125
    %v931 = vmul.f32 %v892, 0.03125
    %v932 = vmul.f32 %v894, 0.03125
    %v933 = vmul.f32 %v896, 0.03125
    %v934 = vmul.f32 %v898, 0.03125
    %v935 = vmul.f32 %v900, 0.03125
    %v936 = vmul.f32 %v902, 0.03125
    %v937 = vmul.f32 %v904, 0.03125
    %v938 = vmul.f32 %v906, 0.03125
    %v939 = vmul.f32 %v779, %v779
    %v940 = vmul.f32 %v780, %v780
    %v941 = vmul.f32 %v781, %v781
    %v942 = vmul.f32 %v782, %v782
    %v943 = vmul.f32 %v783, %v783
    %v944 = vmul.f32 %v784, %v784
    %v945 = vmul.f32 %v785, %v785
    %v946 = vmul.f32 %v786, %v786
    %v947 = vmul.f32 %v787, %v787
    %v948 = vmul.f32 %v788, %v788
    %v949 = vmul.f32 %v789, %v789
    %v950 = vmul.f32 %v790, %v790
    %v951 = vmul.f32 %v791, %v791
    %v952 = vmul.f32 %v792, %v792
    %v953 = vmul.f32 %v793, %v793
    %v954 = vmul.f32 %v794, %v794
    %v955 = vmul.f32 %v795, %v795
    %v956 = vmul.f32 %v796, %v796
    %v957 = vmul.f32 %v797, %v797
    %v958 = vmul.f32 %v798, %v798
    %v959 = vmul.f32 %v799, %v799
    %v960 = vmul.f32 %v800, %v800
    %v961 = vmul.f32 %v801, %v801
    %v962 = vmul.f32 %v802, %v802
    %v963 = vmul.f32 %v803, %v803
    %v964 = vmul.f32 %v804, %v804
    %v965 = vmul.f32 %v805, %v805
    %v966 = vmul.f32 %v806, %v806
    %v967 = vmul.f32 %v807, %v807
    %v968 = vmul.f32 %v808, %v808
    %v969 = vmul.f32 %v809, %v809
    %v970 = vmul.f32 %v810, %v810
    %v971 = vsub.f32 %v907, %v939
    %v972 = vsub.f32 %v908, %v940
    %v973 = vsub.f32 %v909, %v941
    %v974 = vsub.f32 %v910, %v942
    %v975 = vsub.f32 %v911, %v943
    %v976 = vsub.f32 %v912, %v944
    %v977 = vsub.f32 %v913, %v945
    %v978 = vsub.f32 %v914, %v946
    %v979 = vsub.f32 %v915, %v947
    %v980 = vsub.f32 %v916, %v948
    %v981 = vsub.f32 %v917, %v949
    %v982 = vsub.f32 %v918, %v950
    %v983 = vsub.f32 %v919, %v951
    %v984 = vsub.f32 %v920, %v952
    %v985 = vsub.f32 %v921, %v953
    %v986 = vsub.f32 %v922, %v954
    %v987 = vsub.f32 %v923, %v955
    %v988 = vsub.f32 %v924, %v956
    %v989 = vsub.f32 %v925, %v957
    %v990 = vsub.f32 %v926, %v958
    %v991 = vsub.f32 %v927, %v959
    %v992 = vsub.f32 %v928, %v960
    %v993 = vsub.f32 %v929, %v961
    %v994 = vsub.f32 %v930, %v962
    %v995 = vsub.f32 %v931, %v963
    %v996 = vsub.f32 %v932, %v964
    %v997 = vsub.f32 %v933, %v965
    %v998 = vsub.f32 %v934, %v966
    %v999 = vsub.f32 %v935, %v967
    %v1000 = vsub.f32 %v936, %v968
    %v1001 = vsub.f32 %v937, %v969
    %v1002 = vsub.f32 %v938, %v970
    %v1003 = vsub.f32 %v589, %v779
    %v1004 = vsub.f32 %v592, %v780
    %v1005 = vsub.f32 %v597, %v781
    %v1006 = vsub.f32 %v600, %v782
    %v1007 = vsub.f32 %v605, %v783
    %v1008 = vsub.f32 %v608, %v784
    %v1009 = vsub.f32 %v613, %v785
    %v1010 = vsub.f32 %v616, %v786
    %v1011 = vsub.f32 %v621, %v787
    %v1012 = vsub.f32 %v624, %v788
    %v1013 = vsub.f32 %v629, %v789
    %v1014 = vsub.f32 %v632, %v790
    %v1015 = vsub.f32 %v637, %v791
    %v1016 = vsub.f32 %v640, %v792
    %v1017 = vsub.f32 %v645, %v793
    %v1018 = vsub.f32 %v648, %v794
    %v1019 = vsub.f32 %v653, %v795
    %v1020 = vsub.f32 %v656, %v796
    %v1021 = vsub.f32 %v661, %v797
    %v1022 = vsub.f32 %v664, %v798
    %v1023 = vsub.f32 %v669, %v799
    %v1024 = vsub.f32 %v672, %v800
    %v1025 = vsub.f32 %v677, %v801
    %v1026 = vsub.f32 %v680, %v802
    %v1027 = vsub.f32 %v685, %v803
    %v1028 = vsub.f32 %v688, %v804
    %v1029 = vsub.f32 %v693, %v805
    %v1030 = vsub.f32 %v696, %v806
    %v1031 = vsub.f32 %v701, %v807
    %v1032 = vsub.f32 %v704, %v808
    %v1033 = vsub.f32 %v709, %v809
    %v1034 = vsub.f32 %v712, %v810
    %v1035 = vadd.f32 %v971, 1e-05
    %v1036 = vadd.f32 %v972, 1e-05
    %v1037 = vadd.f32 %v973, 1e-05
    %v1038 = vadd.f32 %v974, 1e-05
    %v1039 = vadd.f32 %v975, 1e-05
    %v1040 = vadd.f32 %v976, 1e-05
    %v1041 = vadd.f32 %v977, 1e-05
    %v1042 = vadd.f32 %v978, 1e-05
    %v1043 = vadd.f32 %v979, 1e-05
    %v1044 = vadd.f32 %v980, 1e-05
    %v1045 = vadd.f32 %v981, 1e-05
    %v1046 = vadd.f32 %v982, 1e-05
    %v1047 = vadd.f32 %v983, 1e-05
    %v1048 = vadd.f32 %v984, 1e-05
    %v1049 = vadd.f32 %v985, 1e-05
    %v1050 = vadd.f32 %v986, 1e-05
    %v1051 = vadd.f32 %v987, 1e-05
    %v1052 = vadd.f32 %v988, 1e-05
    %v1053 = vadd.f32 %v989, 1e-05
    %v1054 = vadd.f32 %v990, 1e-05
    %v1055 = vadd.f32 %v991, 1e-05
    %v1056 = vadd.f32 %v992, 1e-05
    %v1057 = vadd.f32 %v993, 1e-05
    %v1058 = vadd.f32 %v994, 1e-05
    %v1059 = vadd.f32 %v995, 1e-05
    %v1060 = vadd.f32 %v996, 1e-05
    %v1061 = vadd.f32 %v997, 1e-05
    %v1062 = vadd.f32 %v998, 1e-05
    %v1063 = vadd.f32 %v999, 1e-05
    %v1064 = vadd.f32 %v1000, 1e-05
    %v1065 = vadd.f32 %v1001, 1e-05
    %v1066 = vadd.f32 %v1002, 1e-05
    %v1067 = vrsqrt.pop %v1035
    %v1068 = vrsqrt.pop %v1036
    %v1069 = vrsqrt.pop %v1037
    %v1070 = vrsqrt.pop %v1038
    %v1071 = vrsqrt.pop %v1039
    %v1072 = vrsqrt.pop %v1040
    %v1073 = vrsqrt.pop %v1041
    %v1074 = vrsqrt.pop %v1042
    %v1075 = vrsqrt.pop %v1043
    %v1076 = vrsqrt.pop %v1044
    %v1077 = vrsqrt.pop %v1045
    %v1078 = vrsqrt.pop %v1046
    %v1079 = vrsqrt.pop %v1047
    %v1080 = vrsqrt.pop %v1048
    %v1081 = vrsqrt.pop %v1049
    %v1082 = vrsqrt.pop %v1050
    %v1083 = vrsqrt.pop %v1051
    %v1084 = vrsqrt.pop %v1052
    %v1085 = vrsqrt.pop %v1053
    %v1086 = vrsqrt.pop %v1054
    %v1087 = vrsqrt.pop %v1055
    %v1088 = vrsqrt.pop %v1056
    %v1089 = vrsqrt.pop %v1057
    %v1090 = vrsqrt.pop %v1058
    %v1091 = vrsqrt.pop %v1059
    %v1092 = vrsqrt.pop %v1060
    %v1093 = vrsqrt.pop %v1061
    %v1094 = vrsqrt.pop %v1062
    %v1095 = vrsqrt.pop %v1063
    %v1096 = vrsqrt.pop %v1064
    %v1097 = vrsqrt.pop %v1065
    %v1098 = vrsqrt.pop %v1066
    %v1099 = vmul.f32 %v1003, %v1067
    %v1100 = vmul.f32 %v1004, %v1068
    %v1101 = vmul.f32 %v1005, %v1069
    %v1102 = vmul.f32 %v1006, %v1070
    %v1103 = vmul.f32 %v1007, %v1071
    %v1104 = vmul.f32 %v1008, %v1072
    %v1105 = vmul.f32 %v1009, %v1073
    %v1106 = vmul.f32 %v1010, %v1074
    %v1107 = vmul.f32 %v1011, %v1075
    %v1108 = vmul.f32 %v1012, %v1076
    %v1109 = vmul.f32 %v1013, %v1077
    %v1110 = vmul.f32 %v1014, %v1078
    %v1111 = vmul.f32 %v1015, %v1079
    %v1112 = vmul.f32 %v1016, %v1080
    %v1113 = vmul.f32 %v1017, %v1081
    %v1114 = vmul.f32 %v1018, %v1082
    %v1115 = vmul.f32 %v1019, %v1083
    %v1116 = vmul.f32 %v1020, %v1084
    %v1117 = vmul.f32 %v1021, %v1085
    %v1118 = vmul.f32 %v1022, %v1086
    %v1119 = vmul.f32 %v1023, %v1087
    %v1120 = vmul.f32 %v1024, %v1088
    %v1121 = vmul.f32 %v1025, %v1089
    %v1122 = vmul.f32 %v1026, %v1090
    %v1123 = vmul.f32 %v1027, %v1091
    %v1124 = vmul.f32 %v1028, %v1092
    %v1125 = vmul.f32 %v1029, %v1093
    %v1126 = vmul.f32 %v1030, %v1094
    %v1127 = vmul.f32 %v1031, %v1095
    %v1128 = vmul.f32 %v1032, %v1096
    %v1129 = vmul.f32 %v1033, %v1097
    %v1130 = vmul.f32 %v1034, %v1098
    %1131 = vst [vmem:[#allocation8] sm:$0xff] %v1099
    %1132 = vst [vmem:[#allocation8 + $0x8] sm:$0xff] %v1100
    %1133 = vst [vmem:[#allocation8 + $0x10] sm:$0xff] %v1101
    %1134 = vst [vmem:[#allocation8 + $0x18] sm:$0xff] %v1102
    %1135 = vst [vmem:[#allocation8 + $0x20] sm:$0xff] %v1103
    %1136 = vst [vmem:[#allocation8 + $0x28] sm:$0xff] %v1104
    %1137 = vst [vmem:[#allocation8 + $0x30] sm:$0xff] %v1105
    %1138 = vst [vmem:[#allocation8 + $0x38] sm:$0xff] %v1106
    %1139 = vst [vmem:[#allocation8 + $0x40] sm:$0xff] %v1107
    %1140 = vst [vmem:[#allocation8 + $0x48] sm:$0xff] %v1108
    %1141 = vst [vmem:[#allocation8 + $0x50] sm:$0xff] %v1109
    %1142 = vst [vmem:[#allocation8 + $0x58] sm:$0xff] %v1110
    %1143 = vst [vmem:[#allocation8 + $0x60] sm:$0xff] %v1111
    %1144 = vst [vmem:[#allocation8 + $0x68] sm:$0xff] %v1112
    %1145 = vst [vmem:[#allocation8 + $0x70] sm:$0xff] %v1113
    %1146 = vst [vmem:[#allocation8 + $0x78] sm:$0xff] %v1114
    %1147 = vst [vmem:[#allocation8 + $0x80] sm:$0xff] %v1115
    %1148 = vst [vmem:[#allocation8 + $0x88] sm:$0xff] %v1116
    %1149 = vst [vmem:[#allocation8 + $0x90] sm:$0xff] %v1117
    %1150 = vst [vmem:[#allocation8 + $0x98] sm:$0xff] %v1118
    %1151 = vst [vmem:[#allocation8 + $0xa0] sm:$0xff] %v1119
    %1152 = vst [vmem:[#allocation8 + $0xa8] sm:$0xff] %v1120
    %1153 = vst [vmem:[#allocation8 + $0xb0] sm:$0xff] %v1121
    %1154 = vst [vmem:[#allocation8 + $0xb8] sm:$0xff] %v1122
    %1155 = vst [vmem:[#allocation8 + $0xc0] sm:$0xff] %v1123
    %1156 = vst [vmem:[#allocation8 + $0xc8] sm:$0xff] %v1124
    %1157 = vst [vmem:[#allocation8 + $0xd0] sm:$0xff] %v1125
    %1158 = vst [vmem:[#allocation8 + $0xd8] sm:$0xff] %v1126
    %1159 = vst [vmem:[#allocation8 + $0xe0] sm:$0xff] %v1127
    %1160 = vst [vmem:[#allocation8 + $0xe8] sm:$0xff] %v1128
    %1161 = vst [vmem:[#allocation8 + $0xf0] sm:$0xff] %v1129
    %1162 = vst [vmem:[#allocation8 + $0xf8] sm:$0xff] %v1130
    // Predicated region
    $region26: #{tpu_custom_call.1} parent=1 // pred_check
      _
    $region27: #{tpu_custom_call.1} parent=1 // pred_check_branch
      %1164 = sbr.rel (0) target = $region29
    $region28: #{tpu_custom_call.1} parent=1 // pred_region
      %s1166 = ssub.s32 4096, 4096
      %1167 = vsyncadd [#allocation4], %s1166
      %s1168 = sshll.u32 [#allocation8], 4
      %s1169 = int_to_ptr.vmem [resolvable:$true] %s1168
      %1174 = dma.vmem_to_hbm [thread:$0]  %s1169, 4096, %s3, [#allocation4], 128, 128, 8
    $region29: #{tpu_custom_call.1} parent=1 // pred_fallthru
      _
    // Predicated region
    $region30: #{tpu_custom_call.1} parent=1 // pred_check
      _
    $region31: #{tpu_custom_call.1} parent=1 // pred_check_branch
      %1176 = sbr.rel (0) target = $region33
    $region32: #{tpu_custom_call.1} parent=1 // pred_region
      %1177 = dma.done [#allocation4], 4096
    $region33: #{tpu_custom_call.1} parent=1 // pred_fallthru
      _
    %1178 = vsyncpa [#allocation3], 1
    %1179 = vsyncpa [#allocation6], 1
    %1180 = vsyncpa [#allocation4], 1

</llo_original>
